<compile_context>
chip_gen: v7x
topology: tpu7x:2x2x1
jax: 0.10.0
libtpu: 0.0.40
codegen_flags: <defaults>
</compile_context>

<pallas_src>
import functools

import jax
import jax.numpy as jnp
from jax.experimental import pallas as pl
from jax.experimental.pallas import tpu as pltpu

IN_FEATURES = 4
HIDDEN = 64
OUT_FEATURES = 2

# Row layout of the packed parameter slab (PARAM_ROWS, HIDDEN):
P_W2 = 0                 # rows  0:64 -> fc3 weight (64, 2), zero-padded to (64, 64)
P_W1 = 64                # rows 64:68 -> fc1 weight (4, 64)
P_B1 = 68                # row  68    -> fc1 bias   (64,)
P_B2 = 69                # row  69    -> fc3 bias   (2,), zero-padded to (64,)
PARAM_ROWS = 72          # padded up to a multiple of 8 sublanes


def dqn_kernel(x_ref, p_ref, o_ref):
    x = x_ref[...].astype(jnp.float32)            # (bb, 4)
    p = p_ref[...]                                # (72, 64): one contiguous load

    w2 = p[P_W2:P_W2 + HIDDEN, :]                 # (64, 64)  real cols 0:2, rest 0
    w1 = p[P_W1:P_W1 + IN_FEATURES, :]            # (4, 64)
    b1 = p[P_B1:P_B1 + 1, :]                      # (1, 64)
    b2 = p[P_B2:P_B2 + 1, :]                      # (1, 64)   real lanes 0:2, rest 0

    # fc1: K=4 contraction done as 4 broadcast FMAs on the VPU (skip the MXU).
    h = b1
    for k in range(IN_FEATURES):
        h = h + x[:, k:k + 1] * w1[k:k + 1, :]    # (bb,1)*(1,64) -> (bb,64)

    # ELU(alpha=1).  Clip before exp so the discarded branch never overflows.
    h = jnp.where(h > 0, h, jnp.exp(jnp.minimum(h, 0.0)) - 1.0)

    # fc3: (bb,64) @ (64,64 lane-padded) on the MXU; only lanes 0:2 are real.
    out = jnp.dot(h, w2, preferred_element_type=jnp.float32) + b2
    o_ref[...] = out[:, :OUT_FEATURES].astype(o_ref.dtype)


@functools.partial(jax.jit, static_argnames=("block_b",))
def dqn_forward(x, params, block_b=512):
    """x: (B, 4) float states; params: packed (72, 64) slab -> (B, 2) Q-values."""
    B = x.shape[0]
    bb = min(block_b, B)              # small batches -> one full-array block
    grid_b = pl.cdiv(B, bb)
    Bp = grid_b * bb
    if Bp != B:                       # pad the ragged tail tile
        x = jnp.pad(x, ((0, Bp - B), (0, 0)))

    out = pl.pallas_call(
        dqn_kernel,
        out_shape=jax.ShapeDtypeStruct((Bp, OUT_FEATURES), jnp.float32),
        grid=(grid_b,),
        in_specs=[
            pl.BlockSpec((bb, IN_FEATURES), lambda i: (i, 0)),
            pl.BlockSpec((PARAM_ROWS, HIDDEN), lambda i: (0, 0)),
        ],
        out_specs=pl.BlockSpec((bb, OUT_FEATURES), lambda i: (i, 0)),
        compiler_params=pltpu.CompilerParams(
            dimension_semantics=("parallel",)),   # v7x: split batch over 2 TCs
    )(x, params)
    return out[:B]


def init_params(key):
    """nn.Linear-style uniform(-1/sqrt(fan_in), +1/sqrt(fan_in)) init.
    Weights are stored already transposed: (in_features, out_features)."""
    k1, k2, k3, k4 = jax.random.split(key, 4)
    bound1 = 1.0 / jnp.sqrt(float(IN_FEATURES))
    bound2 = 1.0 / jnp.sqrt(float(HIDDEN))
    w1 = jax.random.uniform(k1, (IN_FEATURES, HIDDEN), jnp.float32, -bound1, bound1)
    b1 = jax.random.uniform(k2, (HIDDEN,), jnp.float32, -bound1, bound1)
    w2 = jax.random.uniform(k3, (HIDDEN, OUT_FEATURES), jnp.float32, -bound2, bound2)
    b2 = jax.random.uniform(k4, (OUT_FEATURES,), jnp.float32, -bound2, bound2)
    return w1, b1, w2, b2


def pack_params(w1, b1, w2, b2):
    """Pack all parameters into a single (72, 64) f32 slab (one DMA per call)."""
    p = jnp.zeros((PARAM_ROWS, HIDDEN), jnp.float32)
    p = p.at[P_W2:P_W2 + HIDDEN, :OUT_FEATURES].set(w2)
    p = p.at[P_W1:P_W1 + IN_FEATURES, :].set(w1)
    p = p.at[P_B1, :].set(b1)
    p = p.at[P_B2, :OUT_FEATURES].set(b2)
    return p


def dqn_reference(x, w1, b1, w2, b2):
    h = x @ w1 + b1
    h = jnp.where(h > 0, h, jnp.exp(h) - 1.0)
    return h @ w2 + b2


if __name__ == "__main__":
    key = jax.random.PRNGKey(0)
    kx, kp, kx2 = jax.random.split(key, 3)

    w1, b1, w2, b2 = init_params(kp)
    params = pack_params(w1, b1, w2, b2)

    # Small CartPole-style batch: B states x 4 features.
    B = 8
    x = jax.random.normal(kx, (B, 4), jnp.float32)
    out = jax.block_until_ready(dqn_forward(x, params))
    ref = dqn_reference(x, w1, b1, w2, b2)
    assert out.shape == (B, OUT_FEATURES)
    assert jnp.allclose(out, ref, atol=1e-5, rtol=1e-5)

    # Larger replay-buffer-style batch exercises the tiled "parallel" grid path
    # (ragged tail padded to a multiple of the 512-row block).
    B2 = 1037
    x2 = jax.random.normal(kx2, (B2, 4), jnp.float32)
    out2 = jax.block_until_ready(dqn_forward(x2, params))
    ref2 = dqn_reference(x2, w1, b1, w2, b2)
    assert out2.shape == (B2, OUT_FEATURES)
    assert jnp.allclose(out2, ref2, atol=1e-5, rtol=1e-5)

    print("KERNEL_OK")
</pallas_src>

<mosaic_0001>
module attributes {stable_mosaic.version = 11 : i64} {
  func.func @dqn_kernel(%arg0: i32, %arg1: memref<8x4xf32, #tpu.memory_space<vmem>>, %arg2: memref<72x64xf32, #tpu.memory_space<vmem>>, %arg3: memref<8x2xf32, #tpu.memory_space<vmem>>) attributes {dimension_semantics = [#tpu.dimension_semantics<parallel>], iteration_bounds = array<i64: 1>, scalar_prefetch = 0 : i64, scratch_operands = 0 : i64, tpu.core_type = #tpu.core_type<tc>, window_params = [{transform_indices = @transform_0, window_bounds = array<i64: 8, 4>}, {pipeline_mode = #tpu.pipeline_mode<synchronous>, transform_indices = @transform_1, window_bounds = array<i64: 72, 64>}, {transform_indices = @transform_2, window_bounds = array<i64: 8, 2>}]} {
    %c0 = arith.constant 0 : index
    %c0_0 = arith.constant 0 : index
    %0 = vector.load %arg1[%c0, %c0_0] : memref<8x4xf32, #tpu.memory_space<vmem>>, vector<8x4xf32>
    %c0_1 = arith.constant 0 : index
    %c0_2 = arith.constant 0 : index
    %1 = vector.load %arg2[%c0_1, %c0_2] : memref<72x64xf32, #tpu.memory_space<vmem>>, vector<72x64xf32>
    %2 = vector.extract_strided_slice %1 {offsets = [0, 0], sizes = [64, 64], strides = [1, 1]} : vector<72x64xf32> to vector<64x64xf32>
    %3 = vector.extract_strided_slice %1 {offsets = [64, 0], sizes = [4, 64], strides = [1, 1]} : vector<72x64xf32> to vector<4x64xf32>
    %4 = vector.extract_strided_slice %1 {offsets = [68, 0], sizes = [1, 64], strides = [1, 1]} : vector<72x64xf32> to vector<1x64xf32>
    %5 = vector.extract_strided_slice %1 {offsets = [69, 0], sizes = [1, 64], strides = [1, 1]} : vector<72x64xf32> to vector<1x64xf32>
    %6 = vector.extract_strided_slice %0 {offsets = [0, 0], sizes = [8, 1], strides = [1, 1]} : vector<8x4xf32> to vector<8x1xf32>
    %7 = vector.extract_strided_slice %3 {offsets = [0, 0], sizes = [1, 64], strides = [1, 1]} : vector<4x64xf32> to vector<1x64xf32>
    %8 = vector.broadcast %6 : vector<8x1xf32> to vector<8x64xf32>
    %9 = vector.broadcast %7 : vector<1x64xf32> to vector<8x64xf32>
    %10 = arith.mulf %8, %9 : vector<8x64xf32>
    %11 = vector.broadcast %4 : vector<1x64xf32> to vector<8x64xf32>
    %12 = arith.addf %11, %10 : vector<8x64xf32>
    %13 = vector.extract_strided_slice %0 {offsets = [0, 1], sizes = [8, 1], strides = [1, 1]} : vector<8x4xf32> to vector<8x1xf32>
    %14 = vector.extract_strided_slice %3 {offsets = [1, 0], sizes = [1, 64], strides = [1, 1]} : vector<4x64xf32> to vector<1x64xf32>
    %15 = vector.broadcast %13 : vector<8x1xf32> to vector<8x64xf32>
    %16 = vector.broadcast %14 : vector<1x64xf32> to vector<8x64xf32>
    %17 = arith.mulf %15, %16 : vector<8x64xf32>
    %18 = arith.addf %12, %17 : vector<8x64xf32>
    %19 = vector.extract_strided_slice %0 {offsets = [0, 2], sizes = [8, 1], strides = [1, 1]} : vector<8x4xf32> to vector<8x1xf32>
    %20 = vector.extract_strided_slice %3 {offsets = [2, 0], sizes = [1, 64], strides = [1, 1]} : vector<4x64xf32> to vector<1x64xf32>
    %21 = vector.broadcast %19 : vector<8x1xf32> to vector<8x64xf32>
    %22 = vector.broadcast %20 : vector<1x64xf32> to vector<8x64xf32>
    %23 = arith.mulf %21, %22 : vector<8x64xf32>
    %24 = arith.addf %18, %23 : vector<8x64xf32>
    %25 = vector.extract_strided_slice %0 {offsets = [0, 3], sizes = [8, 1], strides = [1, 1]} : vector<8x4xf32> to vector<8x1xf32>
    %26 = vector.extract_strided_slice %3 {offsets = [3, 0], sizes = [1, 64], strides = [1, 1]} : vector<4x64xf32> to vector<1x64xf32>
    %27 = vector.broadcast %25 : vector<8x1xf32> to vector<8x64xf32>
    %28 = vector.broadcast %26 : vector<1x64xf32> to vector<8x64xf32>
    %29 = arith.mulf %27, %28 : vector<8x64xf32>
    %30 = arith.addf %24, %29 : vector<8x64xf32>
    %cst = arith.constant 0.000000e+00 : f32
    %31 = vector.broadcast %cst : f32 to vector<8x64xf32>
    %32 = arith.cmpf ogt, %30, %31 : vector<8x64xf32>
    %cst_3 = arith.constant 0.000000e+00 : f32
    %33 = vector.broadcast %cst_3 : f32 to vector<8x64xf32>
    %34 = arith.minimumf %30, %33 : vector<8x64xf32>
    %35 = math.exp %34 : vector<8x64xf32>
    %cst_4 = arith.constant 1.000000e+00 : f32
    %36 = vector.broadcast %cst_4 : f32 to vector<8x64xf32>
    %37 = arith.subf %35, %36 : vector<8x64xf32>
    %38 = arith.select %32, %30, %37 : vector<8x64xi1>, vector<8x64xf32>
    %cst_5 = arith.constant dense<0.000000e+00> : vector<8x64xf32>
    %39 = tpu.matmul %38, %2, %cst_5 {dimension_numbers = #tpu.dot_dimension_numbers<[1], [0], [0], [1], [0, 0, 1, 1], [], []>} : vector<8x64xf32>, vector<64x64xf32>, vector<8x64xf32> -> vector<8x64xf32>
    %40 = vector.broadcast %5 : vector<1x64xf32> to vector<8x64xf32>
    %41 = arith.addf %39, %40 : vector<8x64xf32>
    %42 = vector.extract_strided_slice %41 {offsets = [0, 0], sizes = [8, 2], strides = [1, 1]} : vector<8x64xf32> to vector<8x2xf32>
    %c0_6 = arith.constant 0 : index
    %c0_7 = arith.constant 0 : index
    %43 = vector.load %arg3[%c0_6, %c0_7] : memref<8x2xf32, #tpu.memory_space<vmem>>, vector<8x2xf32>
    tpu.vector_store %arg3[%c0_6, %c0_7], %42 {strides = array<i32>} : memref<8x2xf32, #tpu.memory_space<vmem>>, vector<8x2xf32>,
    return
  }
  func.func @transform_0(%arg0: i32) -> (i32, i32) {
    %c0_i32 = arith.constant 0 : i32
    %c0_i32_0 = arith.constant 0 : i32
    return %arg0, %c0_i32 : i32, i32
  }
  func.func @transform_1(%arg0: i32) -> (i32, i32) {
    %c0_i32 = arith.constant 0 : i32
    %c0_i32_0 = arith.constant 0 : i32
    %c0_i32_1 = arith.constant 0 : i32
    return %c0_i32, %c0_i32_0 : i32, i32
  }
  func.func @transform_2(%arg0: i32) -> (i32, i32) {
    %c0_i32 = arith.constant 0 : i32
    %c0_i32_0 = arith.constant 0 : i32
    return %arg0, %c0_i32 : i32, i32
  }
}

</mosaic_0001>

<llo_original>
// kernel: dqn_forward.1
$region0: #{dqn_forward.1}
  #allocation0 [shape = 'u32[]', space=smem, size = 0x4, offset = 0x4, fixed_abs, tag = 'smem constant byte address 0x4 - core index']
  #allocation1 [shape = 'u32[144,128]{1,0:T(1,128)}', space=vmem, size = 0x12000, scoped, tag = 'internal scratch']
  %s0 = inlined_call_operand.vmem [shape: f32[8,4], index: 0, kind: input, shape index: {}]
  %s1 = inlined_call_operand.vmem [shape: f32[72,64], index: 1, kind: input, shape index: {}]
  %s2 = inlined_call_operand.vmem [shape: f32[8,2], index: 2, kind: output, shape index: {}]
  %s3 = sld [smem:[#allocation0]]
  $region18: #{dqn_forward.1} parent=0
    _
  %s5 = ssub.s32 1, %s3
  %s6 = scalar_select 0, %s5, %s3
  // Predicated region
  $region2: #{dqn_forward.1} parent=0 // pred_check
    _
  $region3: #{dqn_forward.1} parent=0 // pred_check_branch
    %8 = sbr.rel (0) target = $region5
  $region4: #{dqn_forward.1} parent=0 // pred_region
    _
  $region5: #{dqn_forward.1} parent=0 // pred_fallthru
    _
  // Predicated region
  $region6: #{dqn_forward.1} parent=0 // pred_check
    _
  $region7: #{dqn_forward.1} parent=0 // pred_check_branch
    %10 = sbr.rel (0) target = $region9
  $region8: #{dqn_forward.1} parent=0 // pred_region
    _
  $region9: #{dqn_forward.1} parent=0 // pred_fallthru
    _
  %v11 = vld [vmem:[%s0] sm:$0xff]
  %v12 = vld [vmem:[%s1] sm:$0xff]
  %v13 = vld [vmem:[%s1 + $0x8] sm:$0xff]
  %v14 = vld [vmem:[%s1 + $0x10] sm:$0xff]
  %v15 = vld [vmem:[%s1 + $0x18] sm:$0xff]
  %v16 = vld [vmem:[%s1 + $0x20] sm:$0xff]
  %v17 = vld [vmem:[%s1 + $0x28] sm:$0xff]
  %v18 = vld [vmem:[%s1 + $0x30] sm:$0xff]
  %v19 = vld [vmem:[%s1 + $0x38] sm:$0xff]
  %v20 = vld [vmem:[%s1 + $0x40] sm:$0xff]
  %22 = vset.pattern.permute.xlu0 0
  %23 = vperm.xlu0 %22, %v11
  %v24 = vpop.permute.xlu0 %23
  %v26 = vlaneseq
  %v27 = vshrl.u32 %v26, 7
  %v28 = vsub.s32 0, %v27
  %v29 = vrot.slane %v20, %v28
  %v30 = vmul.f32 %v24, %v29
  %v31 = vlaneseq
  %v32 = vshrl.u32 %v31, 7
  %v33 = vsub.s32 4, %v32
  %v34 = vrot.slane %v20, %v33
  %v35 = vadd.f32 %v34, %v30
  %36 = vset.pattern.permute.xlu0 1
  %37 = vperm.xlu0 %36, %v11
  %v38 = vpop.permute.xlu0 %37
  %v40 = vlaneseq
  %v41 = vshrl.u32 %v40, 7
  %v42 = vsub.s32 1, %v41
  %v43 = vrot.slane %v20, %v42
  %v44 = vmul.f32 %v38, %v43
  %v45 = vadd.f32 %v35, %v44
  %46 = vset.pattern.permute.xlu0 2
  %47 = vperm.xlu0 %46, %v11
  %v48 = vpop.permute.xlu0 %47
  %v50 = vlaneseq
  %v51 = vshrl.u32 %v50, 7
  %v52 = vsub.s32 2, %v51
  %v53 = vrot.slane %v20, %v52
  %v54 = vmul.f32 %v48, %v53
  %v55 = vadd.f32 %v45, %v54
  %56 = vset.pattern.permute.xlu0 3
  %57 = vperm.xlu0 %56, %v11
  %v58 = vpop.permute.xlu0 %57
  %v60 = vlaneseq
  %v61 = vshrl.u32 %v60, 7
  %v62 = vsub.s32 3, %v61
  %v63 = vrot.slane %v20, %v62
  %v64 = vmul.f32 %v58, %v63
  %v65 = vadd.f32 %v55, %v64
  %vm66 = vcmp.gt.f32.partialorder %v65, 0.0
  %v67 = vmin.f32 %v65, 0.0
  %v68 = vmul.f32 %v67, 1.442695
  %v69 = vpow.pop %v68
  %v70 = vsub.f32 %v69, 1.0
  %v71 = vsel %vm66, %v65, %v70
  %v72 = vlaneseq
  %v73 = vshrl.u32 %v72, 7
  %v74 = vsub.s32 5, %v73
  %v75 = vrot.slane %v20, %v74
  %vm76 = vcmask 523264
  %v78 = vsel %vm76, %v71, 0
  %80 = vmatprep.subr.mxu0 0.0
  %81 = vmatpush1.msra.mxu0 %v12
  %82 = vmatprep.subr.mxu0 0.0
  %83 = vmatpush1.msra.mxu0 %v13
  %84 = vmatprep.subr.mxu0 0.0
  %85 = vmatpush1.msra.mxu0 %v14
  %86 = vmatprep.subr.mxu0 0.0
  %87 = vmatpush1.msra.mxu0 %v15
  %88 = vmatprep.subr.mxu0 0.0
  %89 = vmatpush1.msra.mxu0 %v16
  %90 = vmatprep.subr.mxu0 0.0
  %91 = vmatpush1.msra.mxu0 %v17
  %92 = vmatprep.subr.mxu0 0.0
  %93 = vmatpush1.msra.mxu0 %v18
  %94 = vmatprep.subr.mxu0 0.0
  %95 = vmatpush1.msra.mxu0 %v19
  %96 = vmatprep.subr.mxu0 0.0
  %97 = vmatpush1.msra.mxu0 0.0
  %98 = vmatprep.subr.mxu0 0.0
  %99 = vmatpush1.msra.mxu0 0.0
  %100 = vmatprep.subr.mxu0 0.0
  %101 = vmatpush1.msra.mxu0 0.0
  %102 = vmatprep.subr.mxu0 0.0
  %103 = vmatpush1.msra.mxu0 0.0
  %104 = vmatprep.subr.mxu0 0.0
  %105 = vmatpush1.msra.mxu0 0.0
  %106 = vmatprep.subr.mxu0 0.0
  %107 = vmatpush1.msra.mxu0 0.0
  %108 = vmatprep.subr.mxu0 0.0
  %109 = vmatpush1.msra.mxu0 0.0
  %110 = vmatprep.subr.mxu0 0.0
  %111 = vmatpush1.msra.mxu0 0.0
  %112 = vmatprep.subr.mxu0 0.0
  %113 = vmatpush1.msra.mxu0 0.0
  %114 = vmatprep.subr.mxu0 0.0
  %115 = vmatpush1.msra.mxu0 0.0
  %116 = vmatprep.subr.mxu0 0.0
  %117 = vmatpush1.msra.mxu0 0.0
  %118 = vmatprep.subr.mxu0 0.0
  %119 = vmatpush1.msra.mxu0 0.0
  %120 = vmatprep.subr.mxu0 0.0
  %121 = vmatpush1.msra.mxu0 0.0
  %122 = vmatprep.subr.mxu0 0.0
  %123 = vmatpush1.msra.mxu0 0.0
  %124 = vmatprep.subr.mxu0 0.0
  %125 = vmatpush1.msra.mxu0 0.0
  %126 = vmatprep.subr.mxu0 0.0
  %127 = vmatpush1.msra.mxu0 0.0
  %128 = vmatprep.subr.mxu0 0.0
  %129 = vmatpush1.msra.mxu0 0.0
  %130 = vmatprep.subr.mxu0 0.0
  %131 = vmatpush1.msra.mxu0 0.0
  %132 = vmatprep.subr.mxu0 0.0
  %133 = vmatpush1.msra.mxu0 0.0
  %134 = vmatprep.subr.mxu0 0.0
  %135 = vmatpush1.msra.mxu0 0.0
  %136 = vmatprep.subr.mxu0 0.0
  %137 = vmatpush1.msra.mxu0 0.0
  %138 = vmatprep.subr.mxu0 0.0
  %139 = vmatpush1.msra.mxu0 0.0
  %140 = vmatprep.subr.mxu0 0.0
  %141 = vmatpush1.msra.mxu0 0.0
  %142 = vmatprep.subr.mxu0 0.0
  %143 = vmatpush1.msra.mxu0 0.0
  %144 = vmatprep.mubr.f32.mxu0 0.0
  %145 = vmatmul.mubr.f32.gmra.mrb[0].mxu0 %v78
  %v146 = vpop.f32.mrb[0].mxu0
  %v147 = vadd.f32 %v75, %v146
  %v148 = vpop.f32.mrb[0].mxu0
  %149 = vdwg.mxu0
  %vm150 = vcmask 15360
  %151 = vst.msk [vmem:[%s2] sm:$0xff] %vm150, %v147
  // Predicated region
  $region10: #{dqn_forward.1} parent=0 // pred_check
    _
  $region11: #{dqn_forward.1} parent=0 // pred_check_branch
    %153 = sbr.rel (0) target = $region13
  $region12: #{dqn_forward.1} parent=0 // pred_region
    _
  $region13: #{dqn_forward.1} parent=0 // pred_fallthru
    _
  // Predicated region
  $region14: #{dqn_forward.1} parent=0 // pred_check
    _
  $region15: #{dqn_forward.1} parent=0 // pred_check_branch
    %155 = sbr.rel (0) target = $region17
  $region16: #{dqn_forward.1} parent=0 // pred_region
    _
  $region17: #{dqn_forward.1} parent=0 // pred_fallthru
    _

</llo_original>
